<compile_context>
chip_gen: v7x
topology: tpu7x:2x2x1
jax: 0.10.0
libtpu: 0.0.40
codegen_flags: <defaults>
</compile_context>

<pallas_src>
import math

import jax
import jax.numpy as jnp
from jax import lax
from jax.experimental import pallas as pl
from jax.experimental.pallas import tpu as pltpu

_LANE = 128
_TM_CAP = 2048  # 2048x128 f32 block = 1 MiB; in+out double-buffered ~4 MiB.

# murmur3 / golden-ratio 32-bit mixing constants.
_C1 = 0x85EBCA6B
_C2 = 0xC2B2AE35
_GOLD = 0x9E3779B9


def _mix32(v):
    """32-bit avalanching finalizer on uint32 (logical shifts, pure VPU ops)."""
    v = v ^ (v >> 16)
    v = v * jnp.uint32(_C1)
    v = v ^ (v >> 13)
    v = v * jnp.uint32(_C2)
    v = v ^ (v >> 16)
    return v


def _noise_pair(idx_i32, key):
    """Box-Muller pair (z0, z1) from per-element integer counters."""
    b1 = _mix32(idx_i32.astype(jnp.uint32) ^ key)
    # Cheap second stream: one multiply + xorshifts instead of a 2nd finalizer.
    b2 = (b1 ^ (b1 >> 16)) * jnp.uint32(_GOLD)
    b2 = b2 ^ (b2 >> 13)
    inv = jnp.float32(1.0 / (1 << 23))
    u1 = ((b1 >> 9).astype(jnp.float32) + 1.0) * inv   # (0, 1]  (avoids log(0))
    u2 = (b2 >> 9).astype(jnp.float32) * inv           # [0, 1)
    r = jnp.sqrt(jnp.float32(-2.0) * jnp.log(u1))
    theta = jnp.float32(2.0 * math.pi) * u2
    return r * jnp.cos(theta), r * jnp.sin(theta)


def _gaussian_noise_kernel(seed_ref, sigma_ref, x_ref, o_ref):
    tm, lane = x_ref.shape
    sigma = sigma_ref[0]
    key = _mix32(seed_ref[0].astype(jnp.uint32) ^ jnp.uint32(_GOLD))
    base_row = pl.program_id(0) * tm

    if tm % 16 == 0:
        # Fast path: one hash per PAIR of elements (cos + sin branches), each
        # half written directly (no concat -> no full-tile VMEM temporary).
        half = tm // 2
        rowi = lax.broadcasted_iota(jnp.int32, (half, lane), 0)
        coli = lax.broadcasted_iota(jnp.int32, (half, lane), 1)
        idx = (base_row + rowi) * lane + coli  # globally unique per tile
        z0, z1 = _noise_pair(idx, key)
        o_ref[:half, :] = (x_ref[:half, :].astype(jnp.float32)
                           + sigma * z0).astype(o_ref.dtype)
        o_ref[half:, :] = (x_ref[half:, :].astype(jnp.float32)
                           + sigma * z1).astype(o_ref.dtype)
    else:
        # Tiny-tensor fallback (single block, < 16 rows): cos branch only.
        rowi = lax.broadcasted_iota(jnp.int32, (tm, lane), 0)
        coli = lax.broadcasted_iota(jnp.int32, (tm, lane), 1)
        idx = (base_row + rowi) * lane + coli
        z0, _ = _noise_pair(idx, key)
        o_ref[...] = (x_ref[...].astype(jnp.float32)
                      + sigma * z0).astype(o_ref.dtype)


def _round_up(n, m):
    return ((n + m - 1) // m) * m


@jax.jit
def _gaussian_noise_train(x, sigma_arr, seed_arr):
    orig_shape = x.shape
    dtype = x.dtype
    total = x.size

    # Common fast path: total % 128 == 0 -> free reshape, no pad / slice copies.
    if total % _LANE == 0:
        rows = total // _LANE
        x2 = x.reshape(rows, _LANE)
        padded = False
    else:
        # TODO(synk): rare ragged case; could use a masked 1-D tail block
        # instead of this pad/slice round trip.
        rows = pl.cdiv(total, _LANE)
        x2 = jnp.pad(x.reshape(-1), (0, rows * _LANE - total)).reshape(rows, _LANE)
        padded = True

    if rows >= 16:
        # Multiple-of-16 sublane blocks (covers f32/bf16 tiling, keeps the
        # half-split sublane aligned); aim for >= 2 grid steps so the
        # "parallel" axis can shard across both TensorCores on v7x.
        tm = min(_TM_CAP, _round_up(pl.cdiv(rows, 2), 16))
    else:
        tm = rows  # tiny input: single full block
    num_tiles = pl.cdiv(rows, tm)  # ragged tail block is masked by Pallas

    out = pl.pallas_call(
        _gaussian_noise_kernel,
        out_shape=jax.ShapeDtypeStruct((rows, _LANE), dtype),
        grid=(num_tiles,),
        in_specs=[
            pl.BlockSpec(memory_space=pltpu.MemorySpace.SMEM),  # seed  (1,) int32
            pl.BlockSpec(memory_space=pltpu.MemorySpace.SMEM),  # sigma (1,) float32
            pl.BlockSpec((tm, _LANE), lambda i: (i, 0)),
        ],
        out_specs=pl.BlockSpec((tm, _LANE), lambda i: (i, 0)),
        compiler_params=pltpu.CompilerParams(
            dimension_semantics=("parallel",)),
    )(seed_arr, sigma_arr, x2)

    if padded:
        out = out.reshape(-1)[:total]
    return out.reshape(orig_shape)


def gaussian_noise(x, sigma, seed, training=True):
    """Equivalent of GaussianNoise.forward: x + sigma * N(0,1) when training."""
    if not training or x.size == 0:
        return x
    sigma_arr = jnp.asarray([sigma], dtype=jnp.float32)
    seed_arr = jnp.asarray([seed], dtype=jnp.int32)
    return _gaussian_noise_train(x, sigma_arr, seed_arr)


if __name__ == "__main__":
    key = jax.random.PRNGKey(0)
    # Small NCHW input: batch=2, channels=4, spatial=16x16.
    x = jax.random.normal(key, (2, 4, 16, 16), dtype=jnp.float32)
    sigma = 0.1

    # Training mode: noise added inside the Pallas kernel.
    y_train = gaussian_noise(x, sigma=sigma, seed=42, training=True)
    y_train = jax.block_until_ready(y_train)

    # Eval mode: identity (matches PyTorch semantics).
    y_eval = gaussian_noise(x, sigma=sigma, seed=42, training=False)
    y_eval = jax.block_until_ready(y_eval)

    assert y_train.shape == x.shape and y_train.dtype == x.dtype
    assert bool(jnp.all(jnp.isfinite(y_train)))
    assert bool(jnp.allclose(y_eval, x))
    diff = y_train - x
    assert float(jnp.max(jnp.abs(diff))) > 0.0        # noise is nonzero
    assert float(jnp.std(diff)) < 5.0 * sigma         # noise is sigma-scaled
    assert abs(float(jnp.mean(diff))) < 0.05          # noise is ~zero-mean

    print("KERNEL_OK")
</pallas_src>

<mosaic_0001>
module attributes {stable_mosaic.version = 11 : i64} {
  func.func @_gaussian_noise_kernel(%arg0: i32, %arg1: memref<1xi32, #tpu.memory_space<smem>>, %arg2: memref<1xf32, #tpu.memory_space<smem>>, %arg3: memref<16x128xf32, #tpu.memory_space<vmem>>, %arg4: memref<16x128xf32, #tpu.memory_space<vmem>>) attributes {dimension_semantics = [#tpu.dimension_semantics<parallel>], iteration_bounds = array<i64: 1>, scalar_prefetch = 0 : i64, scratch_operands = 0 : i64, tpu.core_type = #tpu.core_type<tc>, window_params = [{transform_indices = @transform_0, window_bounds = array<i64: 1>}, {transform_indices = @transform_1, window_bounds = array<i64: 1>}, {transform_indices = @transform_2, window_bounds = array<i64: 16, 128>}, {transform_indices = @transform_3, window_bounds = array<i64: 16, 128>}]} {
    %c0 = arith.constant 0 : index
    %0 = memref.load %arg2[%c0] : memref<1xf32, #tpu.memory_space<smem>>
    %c0_0 = arith.constant 0 : index
    %1 = memref.load %arg1[%c0_0] : memref<1xi32, #tpu.memory_space<smem>>
    %c-1640531527_i32 = arith.constant -1640531527 : i32
    %2 = arith.xori %1, %c-1640531527_i32 : i32
    %c16_i32 = arith.constant 16 : i32
    %3 = arith.shrui %2, %c16_i32 : i32
    %4 = arith.xori %2, %3 : i32
    %c-2048144789_i32 = arith.constant -2048144789 : i32
    %5 = arith.muli %4, %c-2048144789_i32 : i32
    %c13_i32 = arith.constant 13 : i32
    %6 = arith.shrui %5, %c13_i32 : i32
    %7 = arith.xori %5, %6 : i32
    %c-1028477387_i32 = arith.constant -1028477387 : i32
    %8 = arith.muli %7, %c-1028477387_i32 : i32
    %c16_i32_1 = arith.constant 16 : i32
    %9 = arith.shrui %8, %c16_i32_1 : i32
    %10 = arith.xori %8, %9 : i32
    %c16_i32_2 = arith.constant 16 : i32
    %11 = arith.muli %arg0, %c16_i32_2 : i32
    %12 = tpu.iota {dimensions = array<i32: 0>} : vector<8x128xi32>
    %13 = tpu.iota {dimensions = array<i32: 1>} : vector<8x128xi32>
    %14 = vector.broadcast %11 : i32 to vector<8x128xi32>
    %15 = arith.addi %14, %12 : vector<8x128xi32>
    %c128_i32 = arith.constant 128 : i32
    %16 = vector.broadcast %c128_i32 : i32 to vector<8x128xi32>
    %17 = arith.muli %15, %16 : vector<8x128xi32>
    %18 = arith.addi %17, %13 : vector<8x128xi32>
    %19 = vector.broadcast %10 : i32 to vector<8x128xi32>
    %20 = arith.xori %18, %19 : vector<8x128xi32>
    %c16_i32_3 = arith.constant 16 : i32
    %21 = vector.broadcast %c16_i32_3 : i32 to vector<8x128xi32>
    %22 = arith.shrui %20, %21 : vector<8x128xi32>
    %23 = arith.xori %20, %22 : vector<8x128xi32>
    %c-2048144789_i32_4 = arith.constant -2048144789 : i32
    %24 = vector.broadcast %c-2048144789_i32_4 : i32 to vector<8x128xi32>
    %25 = arith.muli %23, %24 : vector<8x128xi32>
    %c13_i32_5 = arith.constant 13 : i32
    %26 = vector.broadcast %c13_i32_5 : i32 to vector<8x128xi32>
    %27 = arith.shrui %25, %26 : vector<8x128xi32>
    %28 = arith.xori %25, %27 : vector<8x128xi32>
    %c-1028477387_i32_6 = arith.constant -1028477387 : i32
    %29 = vector.broadcast %c-1028477387_i32_6 : i32 to vector<8x128xi32>
    %30 = arith.muli %28, %29 : vector<8x128xi32>
    %c16_i32_7 = arith.constant 16 : i32
    %31 = vector.broadcast %c16_i32_7 : i32 to vector<8x128xi32>
    %32 = arith.shrui %30, %31 : vector<8x128xi32>
    %33 = arith.xori %30, %32 : vector<8x128xi32>
    %c16_i32_8 = arith.constant 16 : i32
    %34 = vector.broadcast %c16_i32_8 : i32 to vector<8x128xi32>
    %35 = arith.shrui %33, %34 : vector<8x128xi32>
    %36 = arith.xori %33, %35 : vector<8x128xi32>
    %c-1640531527_i32_9 = arith.constant -1640531527 : i32
    %37 = vector.broadcast %c-1640531527_i32_9 : i32 to vector<8x128xi32>
    %38 = arith.muli %36, %37 : vector<8x128xi32>
    %c13_i32_10 = arith.constant 13 : i32
    %39 = vector.broadcast %c13_i32_10 : i32 to vector<8x128xi32>
    %40 = arith.shrui %38, %39 : vector<8x128xi32>
    %41 = arith.xori %38, %40 : vector<8x128xi32>
    %c9_i32 = arith.constant 9 : i32
    %42 = vector.broadcast %c9_i32 : i32 to vector<8x128xi32>
    %43 = arith.shrui %33, %42 : vector<8x128xi32>
    %44 = arith.uitofp %43 : vector<8x128xi32> to vector<8x128xf32>
    %cst = arith.constant 1.000000e+00 : f32
    %45 = vector.broadcast %cst : f32 to vector<8x128xf32>
    %46 = arith.addf %44, %45 : vector<8x128xf32>
    %cst_11 = arith.constant 1.1920929E-7 : f32
    %47 = vector.broadcast %cst_11 : f32 to vector<8x128xf32>
    %48 = arith.mulf %46, %47 : vector<8x128xf32>
    %c9_i32_12 = arith.constant 9 : i32
    %49 = vector.broadcast %c9_i32_12 : i32 to vector<8x128xi32>
    %50 = arith.shrui %41, %49 : vector<8x128xi32>
    %51 = arith.uitofp %50 : vector<8x128xi32> to vector<8x128xf32>
    %cst_13 = arith.constant 1.1920929E-7 : f32
    %52 = vector.broadcast %cst_13 : f32 to vector<8x128xf32>
    %53 = arith.mulf %51, %52 : vector<8x128xf32>
    %54 = math.log %48 : vector<8x128xf32>
    %cst_14 = arith.constant -2.000000e+00 : f32
    %55 = vector.broadcast %cst_14 : f32 to vector<8x128xf32>
    %56 = arith.mulf %55, %54 : vector<8x128xf32>
    %57 = math.sqrt %56 : vector<8x128xf32>
    %cst_15 = arith.constant 6.28318548 : f32
    %58 = vector.broadcast %cst_15 : f32 to vector<8x128xf32>
    %59 = arith.mulf %58, %53 : vector<8x128xf32>
    %60 = math.cos %59 : vector<8x128xf32>
    %61 = arith.mulf %57, %60 : vector<8x128xf32>
    %62 = math.sin %59 : vector<8x128xf32>
    %63 = arith.mulf %57, %62 : vector<8x128xf32>
    %c0_16 = arith.constant 0 : index
    %c0_17 = arith.constant 0 : index
    %64 = vector.load %arg3[%c0_16, %c0_17] : memref<16x128xf32, #tpu.memory_space<vmem>>, vector<8x128xf32>
    %65 = vector.broadcast %0 : f32 to vector<8x128xf32>
    %66 = arith.mulf %65, %61 : vector<8x128xf32>
    %67 = arith.addf %64, %66 : vector<8x128xf32>
    %c0_18 = arith.constant 0 : index
    %c0_19 = arith.constant 0 : index
    %68 = vector.load %arg4[%c0_18, %c0_19] : memref<16x128xf32, #tpu.memory_space<vmem>>, vector<8x128xf32>
    tpu.vector_store %arg4[%c0_18, %c0_19], %67 {strides = array<i32>} : memref<16x128xf32, #tpu.memory_space<vmem>>, vector<8x128xf32>,
    %c8 = arith.constant 8 : index
    %c0_20 = arith.constant 0 : index
    %69 = vector.load %arg3[%c8, %c0_20] : memref<16x128xf32, #tpu.memory_space<vmem>>, vector<8x128xf32>
    %70 = vector.broadcast %0 : f32 to vector<8x128xf32>
    %71 = arith.mulf %70, %63 : vector<8x128xf32>
    %72 = arith.addf %69, %71 : vector<8x128xf32>
    %c8_21 = arith.constant 8 : index
    %c0_22 = arith.constant 0 : index
    %73 = vector.load %arg4[%c8_21, %c0_22] : memref<16x128xf32, #tpu.memory_space<vmem>>, vector<8x128xf32>
    tpu.vector_store %arg4[%c8_21, %c0_22], %72 {strides = array<i32>} : memref<16x128xf32, #tpu.memory_space<vmem>>, vector<8x128xf32>,
    return
  }
  func.func @transform_0(%arg0: i32) -> i32 {
    %c0_i32 = arith.constant 0 : i32
    %c0_i32_0 = arith.constant 0 : i32
    return %c0_i32 : i32
  }
  func.func @transform_1(%arg0: i32) -> i32 {
    %c0_i32 = arith.constant 0 : i32
    %c0_i32_0 = arith.constant 0 : i32
    return %c0_i32 : i32
  }
  func.func @transform_2(%arg0: i32) -> (i32, i32) {
    %c0_i32 = arith.constant 0 : i32
    %c0_i32_0 = arith.constant 0 : i32
    return %arg0, %c0_i32 : i32, i32
  }
  func.func @transform_3(%arg0: i32) -> (i32, i32) {
    %c0_i32 = arith.constant 0 : i32
    %c0_i32_0 = arith.constant 0 : i32
    return %arg0, %c0_i32 : i32, i32
  }
}

</mosaic_0001>

<llo_original>
// kernel: _gaussian_noise_train.1
$region0: #{_gaussian_noise_train.1}
  #allocation0 [shape = 'u32[]', space=smem, size = 0x4, offset = 0x4, fixed_abs, tag = 'smem constant byte address 0x4 - core index']
  #allocation1 [shape = 'u32[144,128]{1,0:T(1,128)}', space=vmem, size = 0x12000, scoped, tag = 'internal scratch']
  #allocation2 [shape = 's32[1]{0:T(128)S(6)}', space=smem, size = 0x200, scoped, tag = 'scoped memory for _gaussian_noise_train.1']
  #allocation3 [shape = 'f32[1]{0:T(128)S(6)}', space=smem, size = 0x200, scoped, tag = 'scoped memory for _gaussian_noise_train.1']
  %s0 = inlined_call_operand.<no memory space> [shape: s32[1], index: 0, kind: input, shape index: {}]
  %s1 = inlined_call_operand.<no memory space> [shape: f32[1], index: 1, kind: input, shape index: {}]
  %s2 = inlined_call_operand.vmem [shape: f32[16,128], index: 2, kind: input, shape index: {}]
  %s3 = inlined_call_operand.vmem [shape: f32[16,128], index: 3, kind: output, shape index: {}]
  %s4 = sld [smem:[#allocation0]]
  $region22: #{_gaussian_noise_train.1} parent=0
    _
  %s6 = ssub.s32 1, %s4
  %s7 = scalar_select 0, %s6, %s4
  %8 = sst [smem:[#allocation2]] %s0
  %9 = sst [smem:[#allocation3]] %s1
  // Predicated region
  $region2: #{_gaussian_noise_train.1} parent=0 // pred_check
    _
  $region3: #{_gaussian_noise_train.1} parent=0 // pred_check_branch
    %11 = sbr.rel (0) target = $region5
  $region4: #{_gaussian_noise_train.1} parent=0 // pred_region
    _
  $region5: #{_gaussian_noise_train.1} parent=0 // pred_fallthru
    _
  // Predicated region
  $region6: #{_gaussian_noise_train.1} parent=0 // pred_check
    _
  $region7: #{_gaussian_noise_train.1} parent=0 // pred_check_branch
    %13 = sbr.rel (0) target = $region9
  $region8: #{_gaussian_noise_train.1} parent=0 // pred_region
    _
  $region9: #{_gaussian_noise_train.1} parent=0 // pred_fallthru
    _
  // Predicated region
  $region10: #{_gaussian_noise_train.1} parent=0 // pred_check
    _
  $region11: #{_gaussian_noise_train.1} parent=0 // pred_check_branch
    %15 = sbr.rel (0) target = $region13
  $region12: #{_gaussian_noise_train.1} parent=0 // pred_region
    _
  $region13: #{_gaussian_noise_train.1} parent=0 // pred_fallthru
    _
  %s16 = sld [smem:[#allocation3]]
  %s17 = sld [smem:[#allocation2]]
  %s18 = sxor.u32 %s17, 2654435769
  %s19 = sshrl.u32 %s18, 16
  %s20 = sxor.u32 %s18, %s19
  %s21 = smul.u32 %s20, 2246822507
  %s22 = sshrl.u32 %s21, 13
  %s23 = sxor.u32 %s21, %s22
  %s24 = smul.u32 %s23, 3266489909
  %s25 = sshrl.u32 %s24, 16
  %s26 = sxor.u32 %s24, %s25
  %s27 = smul.u32 0, 16
  %v28 = vlaneseq
  %v29 = vshrl.u32 %v28, 7
  %v30 = vlaneseq
  %v31 = vand.u32 %v30, 127
  %v32 = vstv %s27
  %v33 = vadd.s32 %v32, %v29
  %v34 = vmul.u32 %v33, 128
  %v35 = vadd.s32 %v34, %v31
  %v36 = vstv %s26
  %v37 = vxor.u32 %v35, %v36
  %v38 = vshrl.u32 %v37, 16
  %v39 = vxor.u32 %v37, %v38
  %v40 = vmul.u32 %v39, 2246822507
  %v41 = vshrl.u32 %v40, 13
  %v42 = vxor.u32 %v40, %v41
  %v43 = vmul.u32 %v42, 3266489909
  %v44 = vshrl.u32 %v43, 16
  %v45 = vxor.u32 %v43, %v44
  %v46 = vshrl.u32 %v45, 16
  %v47 = vxor.u32 %v45, %v46
  %v48 = vmul.u32 %v47, 2654435769
  %v49 = vshrl.u32 %v48, 13
  %v50 = vxor.u32 %v48, %v49
  %v51 = vshrl.u32 %v45, 9
  %v52 = vshrl.u32 %v51, 16
  %v53 = vand.u32 %v51, 65535
  %v54 = vcvt.s32.f32 %v52
  %v55 = vmul.f32 %v54, 65536.0
  %v56 = vcvt.s32.f32 %v53
  %v57 = vadd.f32 %v55, %v56
  %v58 = vadd.f32 %v57, 1.0
  %v59 = vmul.f32 %v58, 1.1920929e-07
  %v60 = vshrl.u32 %v50, 9
  %v61 = vshrl.u32 %v60, 16
  %v62 = vand.u32 %v60, 65535
  %v63 = vcvt.s32.f32 %v61
  %v64 = vmul.f32 %v63, 65536.0
  %v65 = vcvt.s32.f32 %v62
  %v66 = vadd.f32 %v64, %v65
  %v67 = vmul.f32 %v66, 1.1920929e-07
  %v68 = vlog2.pop %v59
  %v69 = vmul.f32 %v68, 0.6931472
  %v70 = vmul.f32 %v69, -2.0
  %v71 = vrsqrt.pop %v70
  %v72 = vmul.f32 %v70, %v71
  %vm73 = vcmp.eq.f32.partialorder %v70, inf
  %v74 = vsel %vm73, %v70, %v72
  %vm75 = vcmp.eq.f32.partialorder %v70, 0.0
  %v76 = vand.u32 %v70, 2147483648
  %v77 = vsel %vm75, %v76, %v74
  %v78 = vmul.f32 %v67, 6.2831855
  %v79 = vand.u32 2147483647, %v78
  %vm80 = vcmp.le.f32.partialorder %v79, 0.7853982
  %vm81 = vcmp.lt.s32.totalorder %v78, 0
  %v82 = vand.u32 %v78, 2139095040
  %v83 = vshrl.u32 %v82, 23
  %v84 = vsub.s32 %v83, 127
  %v85 = vand.u32 2147483647, %v78
  %v86 = vand.u32 %v85, 8388607
  %v87 = vor.u32 %v86, 8388608
  %v88 = vsub.s32 0, %v87
  %v89 = vadd.s32 %v84, 1
  %vm90 = vcmp.gt.s32.totalorder %v89, 0
  %v91 = vsel %vm90, %v89, 0
  %v92 = vshrl.u32 %v91, 5
  %v93 = vand.u32 %v91, 31
  %v94 = vsub.s32 32, %v93
  %v95 = vshrl.u32 683565275, %v94
  %v96 = vshll.u32 683565275, %v93
  %v97 = vshrl.u32 2475754826, %v94
  %v98 = vor.u32 %v96, %v97
  %v99 = vshll.u32 2475754826, %v93
  %v100 = vshrl.u32 2131351028, %v94
  %v101 = vor.u32 %v99, %v100
  %v102 = vshll.u32 2131351028, %v93
  %v103 = vshrl.u32 2102212464, %v94
  %v104 = vor.u32 %v102, %v103
  %v105 = vshll.u32 2102212464, %v93
  %v106 = vshrl.u32 920167782, %v94
  %v107 = vor.u32 %v105, %v106
  %v108 = vshll.u32 920167782, %v93
  %v109 = vshrl.u32 1326507024, %v94
  %v110 = vor.u32 %v108, %v109
  %vm111 = vcmp.lt.s32.totalorder %v92, 1
  %vm112 = vcmp.lt.s32.totalorder %v92, 2
  %vm113 = vcmp.lt.s32.totalorder %v92, 3
  %vm114 = vcmp.lt.s32.totalorder %v92, 4
  %v115 = vsel %vm111, %v95, %v98
  %v116 = vsel %vm114, %v104, 2102212464
  %v117 = vsel %vm113, %v101, %v116
  %v118 = vsel %vm112, %v115, %v117
  %v119 = vsel %vm111, %v98, %v101
  %v120 = vsel %vm114, %v107, 920167782
  %v121 = vsel %vm113, %v104, %v120
  %v122 = vsel %vm112, %v119, %v121
  %v123 = vsel %vm111, %v101, %v104
  %v124 = vsel %vm114, %v110, 1326507024
  %v125 = vsel %vm113, %v107, %v124
  %v126 = vsel %vm112, %v123, %v125
  %v127 = vshll.u32 %v87, 8
  %v128 = vmul.u32.u64.compose %v127, %v126
  %v129 = vextract.low.u32 %v128
  %v130 = vextract.high.u32 %v128
  %v131 = vmul.u32.u64.compose %v127, %v122
  %v132 = vextract.low.u32 %v131
  %v133 = vextract.high.u32 %v131
  %v134 = vmul.u32 %v127, %v118
  %v135 = vadd.s32 %v130, %v132
  %vm136 = vc.u32 %v130, %v132
  %v137 = vadd.s32 %v133, 1
  %v138 = vsel %vm136, %v137, %v133
  %v139 = vadd.s32 %v134, %v138
  %v140 = vadd.s32 %v139, 536870912
  %v141 = vshrl.u32 %v140, 30
  %v142 = vshll.u32 %v141, 30
  %v143 = vsub.s32 %v139, %v142
  %vm144 = vcmp.lt.s32.totalorder %v143, 0
  %v145 = vsub.s32 0, %v143
  %v146 = vsel %vm144, %v145, %v143
  %v147 = vclz %v146
  %v148 = vsub.s32 %v147, 2
  %vm149 = vcmp.gt.s32.totalorder 0, %v148
  %v150 = vsel %vm149, 0, %v148
  %v151 = vsub.s32 32, %v150
  %v152 = vshll.u32 %v143, %v150
  %v153 = vshrl.u32 %v135, %v151
  %v154 = vor.u32 %v152, %v153
  %v155 = vsub.s32 4294967266, %v150
  %v156 = vadd.s32 %v155, 127
  %v157 = vshll.u32 %v156, 23
  %v158 = vor.u32 4788187, %v157
  %v159 = vand.u32 2147483647, %v158
  %v161 = vcvt.s32.f32 %v154
  %v162 = vmul.f32 %v161, %v159
  %v163 = vxor.u32 %v162, 2147483648
  %v164 = vsel %vm81, %v163, %v162
  %v165 = vsub.s32 4, %v141
  %v166 = vsel %vm81, %v165, %v141
  %v167 = vsel %vm80, %v78, %v164
  %v168 = vsel %vm80, 0, %v166
  %v169 = vcosq.f32.pop %v167
  %v170 = vsinq.f32.pop %v167
  %vm171 = vweird.f32 %v78
  %v172 = vand.u32 %v168, 3
  %vm173 = vcmp.lt.s32.totalorder %v172, 2
  %vm174 = vcmp.eq.s32.totalorder %v172, 0
  %v175 = vxor.u32 %v170, 2147483648
  %v176 = vsel %vm174, %v169, %v175
  %vm177 = vcmp.eq.s32.totalorder %v172, 2
  %v178 = vxor.u32 %v169, 2147483648
  %v179 = vsel %vm177, %v178, %v170
  %v180 = vsel %vm173, %v176, %v179
  %v181 = vsel %vm171, nan, %v180
  %v182 = vmul.f32 %v77, %v181
  %v183 = vand.u32 2147483647, %v78
  %vm184 = vcmp.le.f32.partialorder %v183, 0.7853982
  %vm185 = vcmp.lt.s32.totalorder %v78, 0
  %v186 = vand.u32 %v78, 2139095040
  %v187 = vshrl.u32 %v186, 23
  %v188 = vsub.s32 %v187, 127
  %v189 = vand.u32 2147483647, %v78
  %v190 = vand.u32 %v189, 8388607
  %v191 = vor.u32 %v190, 8388608
  %v192 = vsub.s32 0, %v191
  %v193 = vadd.s32 %v188, 1
  %vm194 = vcmp.gt.s32.totalorder %v193, 0
  %v195 = vsel %vm194, %v193, 0
  %v196 = vshrl.u32 %v195, 5
  %v197 = vand.u32 %v195, 31
  %v198 = vsub.s32 32, %v197
  %v199 = vshrl.u32 683565275, %v198
  %v200 = vshll.u32 683565275, %v197
  %v201 = vshrl.u32 2475754826, %v198
  %v202 = vor.u32 %v200, %v201
  %v203 = vshll.u32 2475754826, %v197
  %v204 = vshrl.u32 2131351028, %v198
  %v205 = vor.u32 %v203, %v204
  %v206 = vshll.u32 2131351028, %v197
  %v207 = vshrl.u32 2102212464, %v198
  %v208 = vor.u32 %v206, %v207
  %v209 = vshll.u32 2102212464, %v197
  %v210 = vshrl.u32 920167782, %v198
  %v211 = vor.u32 %v209, %v210
  %v212 = vshll.u32 920167782, %v197
  %v213 = vshrl.u32 1326507024, %v198
  %v214 = vor.u32 %v212, %v213
  %vm215 = vcmp.lt.s32.totalorder %v196, 1
  %vm216 = vcmp.lt.s32.totalorder %v196, 2
  %vm217 = vcmp.lt.s32.totalorder %v196, 3
  %vm218 = vcmp.lt.s32.totalorder %v196, 4
  %v219 = vsel %vm215, %v199, %v202
  %v220 = vsel %vm218, %v208, 2102212464
  %v221 = vsel %vm217, %v205, %v220
  %v222 = vsel %vm216, %v219, %v221
  %v223 = vsel %vm215, %v202, %v205
  %v224 = vsel %vm218, %v211, 920167782
  %v225 = vsel %vm217, %v208, %v224
  %v226 = vsel %vm216, %v223, %v225
  %v227 = vsel %vm215, %v205, %v208
  %v228 = vsel %vm218, %v214, 1326507024
  %v229 = vsel %vm217, %v211, %v228
  %v230 = vsel %vm216, %v227, %v229
  %v231 = vshll.u32 %v191, 8
  %v232 = vmul.u32.u64.compose %v231, %v230
  %v233 = vextract.low.u32 %v232
  %v234 = vextract.high.u32 %v232
  %v235 = vmul.u32.u64.compose %v231, %v226
  %v236 = vextract.low.u32 %v235
  %v237 = vextract.high.u32 %v235
  %v238 = vmul.u32 %v231, %v222
  %v239 = vadd.s32 %v234, %v236
  %vm240 = vc.u32 %v234, %v236
  %v241 = vadd.s32 %v237, 1
  %v242 = vsel %vm240, %v241, %v237
  %v243 = vadd.s32 %v238, %v242
  %v244 = vadd.s32 %v243, 536870912
  %v245 = vshrl.u32 %v244, 30
  %v246 = vshll.u32 %v245, 30
  %v247 = vsub.s32 %v243, %v246
  %vm248 = vcmp.lt.s32.totalorder %v247, 0
  %v249 = vsub.s32 0, %v247
  %v250 = vsel %vm248, %v249, %v247
  %v251 = vclz %v250
  %v252 = vsub.s32 %v251, 2
  %vm253 = vcmp.gt.s32.totalorder 0, %v252
  %v254 = vsel %vm253, 0, %v252
  %v255 = vsub.s32 32, %v254
  %v256 = vshll.u32 %v247, %v254
  %v257 = vshrl.u32 %v239, %v255
  %v258 = vor.u32 %v256, %v257
  %v259 = vsub.s32 4294967266, %v254
  %v260 = vadd.s32 %v259, 127
  %v261 = vshll.u32 %v260, 23
  %v262 = vor.u32 4788187, %v261
  %v263 = vand.u32 2147483647, %v262
  %v265 = vcvt.s32.f32 %v258
  %v266 = vmul.f32 %v265, %v263
  %v267 = vxor.u32 %v266, 2147483648
  %v268 = vsel %vm185, %v267, %v266
  %v269 = vsub.s32 4, %v245
  %v270 = vsel %vm185, %v269, %v245
  %v271 = vsel %vm184, %v78, %v268
  %v272 = vsel %vm184, 0, %v270
  %v273 = vcosq.f32.pop %v271
  %v274 = vsinq.f32.pop %v271
  %vm275 = vweird.f32 %v78
  %v276 = vadd.s32 %v272, 3
  %v277 = vand.u32 %v276, 3
  %vm278 = vcmp.lt.s32.totalorder %v277, 2
  %vm279 = vcmp.eq.s32.totalorder %v277, 0
  %v280 = vxor.u32 %v274, 2147483648
  %v281 = vsel %vm279, %v273, %v280
  %vm282 = vcmp.eq.s32.totalorder %v277, 2
  %v283 = vxor.u32 %v273, 2147483648
  %v284 = vsel %vm282, %v283, %v274
  %v285 = vsel %vm278, %v281, %v284
  %v286 = vsel %vm275, nan, %v285
  %v287 = vmul.f32 %v77, %v286
  %v288 = vld [vmem:[%s2] sm:$0xff]
  %v289 = vstv %s16
  %v290 = vmul.f32 %v289, %v182
  %v291 = vadd.f32 %v288, %v290
  %292 = vst [vmem:[%s3] sm:$0xff] %v291
  %v293 = vld [vmem:[%s2 + $0x8] sm:$0xff]
  %v294 = vmul.f32 %v289, %v287
  %v295 = vadd.f32 %v293, %v294
  %296 = vst [vmem:[%s3 + $0x8] sm:$0xff] %v295
  // Predicated region
  $region14: #{_gaussian_noise_train.1} parent=0 // pred_check
    _
  $region15: #{_gaussian_noise_train.1} parent=0 // pred_check_branch
    %298 = sbr.rel (0) target = $region17
  $region16: #{_gaussian_noise_train.1} parent=0 // pred_region
    _
  $region17: #{_gaussian_noise_train.1} parent=0 // pred_fallthru
    _
  // Predicated region
  $region18: #{_gaussian_noise_train.1} parent=0 // pred_check
    _
  $region19: #{_gaussian_noise_train.1} parent=0 // pred_check_branch
    %300 = sbr.rel (0) target = $region21
  $region20: #{_gaussian_noise_train.1} parent=0 // pred_region
    _
  $region21: #{_gaussian_noise_train.1} parent=0 // pred_fallthru
    _

</llo_original>
